<compile_context>
chip_gen: v5e
topology: v5e:2x2
jax: 0.10.0
libtpu: 0.0.40
codegen_flags: <defaults>
</compile_context>

<pallas_src>
import functools

import jax
import jax.numpy as jnp
from jax.experimental import pallas as pl
from jax.experimental.pallas import tpu as pltpu

_LANE = 128
_SUBLANE = 8


def _round_up(v, m):
    return ((v + m - 1) // m) * m


def _dec_kernel(x_ref, mu_t_ref, musq_ref, q_ref, *, alpha, k_valid):
    # x_ref:    (TM, D)     batch tile, native dtype (bf16 stays bf16 for MXU)
    # mu_t_ref: (D, K_out)  transposed cluster centers (grid-invariant)
    # musq_ref: (1, K_out)  ||mu_j||^2 in f32 (grid-invariant)
    # q_ref:    (TM, K_out) soft assignments for this tile
    x = x_ref[...]
    mu_t = mu_t_ref[...]
    musq = musq_ref[...]                                            # f32

    # ||x_i - mu_j||^2 = ||x_i||^2 + ||mu_j||^2 - 2 x_i.mu_j  (MXU cross term).
    xf = x.astype(jnp.float32)
    xsq = jnp.sum(xf * xf, axis=-1, keepdims=True)                  # (TM, 1)
    cross = jnp.dot(x, mu_t, preferred_element_type=jnp.float32)    # MXU, native in
    dist2 = jnp.maximum(xsq + musq - 2.0 * cross, 0.0)

    q = 1.0 / (1.0 + dist2 * (1.0 / alpha))                         # alpha folds

    k_out = q.shape[-1]
    if k_valid < k_out:
        # Lane-padded output: force padded columns to 0 before pow / row-sum.
        col = jax.lax.broadcasted_iota(jnp.int32, q.shape, 1)
        q = jnp.where(col < k_valid, q, 0.0)

    exponent = (alpha + 1.0) / 2.0                                  # compile-time
    if exponent != 1.0:
        if float(exponent).is_integer() and 2.0 <= exponent <= 8.0:
            p = q
            for _ in range(int(exponent) - 1):                      # VPU multiplies
                p = p * q
            q = p
        else:
            q = q ** exponent                                       # EUP exp+log

    denom = jnp.sum(q, axis=-1, keepdims=True)
    q = q * pl.reciprocal(denom, approx=False)                      # exact: rows sum to 1
    q_ref[...] = q.astype(q_ref.dtype)


def clustering_layer_forward(x, mu, *, alpha=1.0, tm=1024,
                             vmem_budget_bytes=24 << 20):
    """Soft cluster assignment q = student-t(x, mu), row-normalized."""
    N, D = x.shape
    K, D2 = mu.shape
    assert D == D2, "hidden dims of x and mu must match"

    out_dtype = x.dtype
    x_bytes = jnp.dtype(x.dtype).itemsize
    mu_bytes = jnp.dtype(mu.dtype).itemsize
    out_bytes = jnp.dtype(out_dtype).itemsize

    # Lane-dense output: pad K to a lane multiple only when per-row reads still
    # dominate the padded per-row writes (D >> K case).
    k_pad = _round_up(K, _LANE)
    lane_dense = (K % _LANE != 0) and (D * x_bytes >= k_pad * out_bytes)
    k_out = k_pad if lane_dense else K

    # Grid-invariant center preprocessing hoisted out of the kernel.
    mu_t = mu.T                                                     # (D, K), native dtype
    mu_f32 = mu.astype(jnp.float32)
    musq = jnp.sum(mu_f32 * mu_f32, axis=-1, keepdims=True).T       # (1, K), f32
    if lane_dense:
        mu_t = jnp.pad(mu_t, ((0, 0), (0, k_out - K)))
        musq = jnp.pad(musq, ((0, 0), (0, k_out - K)))

    # Single-buffer the grid-invariant inputs when the API supports it.
    if getattr(pl, "Buffered", None) is not None:
        resident_spec = lambda shape: pl.BlockSpec(
            shape, lambda i: (0, 0), pipeline_mode=pl.Buffered(1))
        n_res_bufs = 1
    else:
        resident_spec = lambda shape: pl.BlockSpec(shape, lambda i: (0, 0))
        n_res_bufs = 2

    # Approximate (8,128)-padded VMEM accounting: size the batch tile from a
    # budget and raise the scoped-VMEM limit explicitly.
    lanes_d = _round_up(D, _LANE)
    lanes_k = _round_up(k_out, _LANE)
    resident_bytes = n_res_bufs * (
        _round_up(D, _SUBLANE) * lanes_k * mu_bytes + _SUBLANE * lanes_k * 4)
    per_row_bytes = 2 * (lanes_d * x_bytes + lanes_k * out_bytes)   # double-buffered
    tm_budget = (vmem_budget_bytes - resident_bytes) // per_row_bytes
    tm_budget = max(_SUBLANE, (tm_budget // _SUBLANE) * _SUBLANE)

    n_rounded = _round_up(N, _SUBLANE)
    tm_eff = max(_SUBLANE, min(int(tm), tm_budget, n_rounded))
    tm_eff = (tm_eff // _SUBLANE) * _SUBLANE

    # v7x: keep the "parallel" axis at >= 2 steps when the batch allows, so
    # both TensorCores get work.
    if pl.cdiv(N, tm_eff) < 2 and N > _SUBLANE:
        tm_eff = max(_SUBLANE, _round_up(pl.cdiv(N, 2), _SUBLANE))

    grid = (pl.cdiv(N, tm_eff),)

    tile_bytes = tm_eff * per_row_bytes
    vmem_limit = int(min(max(resident_bytes + tile_bytes + (2 << 20), 16 << 20),
                         64 << 20))

    kernel = functools.partial(_dec_kernel, alpha=float(alpha), k_valid=K)
    q = pl.pallas_call(
        kernel,
        out_shape=jax.ShapeDtypeStruct((N, k_out), out_dtype),
        grid_spec=pltpu.PrefetchScalarGridSpec(
            num_scalar_prefetch=0,
            grid=grid,
            in_specs=[
                pl.BlockSpec((tm_eff, D), lambda i: (i, 0)),        # batch tile
                resident_spec((D, k_out)),                          # mu^T, resident
                resident_spec((1, k_out)),                          # ||mu||^2, resident
            ],
            out_specs=pl.BlockSpec((tm_eff, k_out), lambda i: (i, 0)),
        ),
        compiler_params=pltpu.CompilerParams(
            dimension_semantics=("parallel",),
            vmem_limit_bytes=vmem_limit,
        ),
    )(x, mu_t, musq)

    return q[:, :K] if lane_dense else q


def _reference(x, mu, alpha=1.0):
    # Pure-JAX reference matching the PyTorch forward exactly.
    diff = x[:, None, :].astype(jnp.float32) - mu[None, :, :].astype(jnp.float32)
    q = 1.0 / (1.0 + jnp.sum(diff * diff, axis=2) / alpha)
    q = q ** ((alpha + 1.0) / 2.0)
    return q / jnp.sum(q, axis=1, keepdims=True)


# TODO(synk): kmeans_init uses sklearn KMeans on host; it is not a forward-pass
# op and has no Pallas equivalent, so it is intentionally omitted.

if __name__ == "__main__":
    key = jax.random.PRNGKey(0)
    kx, kmu, kx2, kmu2 = jax.random.split(key, 4)

    # --- Case 1: small K and D (no lane padding), default alpha=1. ---
    n_clusters, hidden_dim, batch = 8, 32, 16
    bound = (6.0 / (n_clusters + hidden_dim)) ** 0.5        # xavier_uniform-style
    mu = jax.random.uniform(kmu, (n_clusters, hidden_dim), jnp.float32,
                            minval=-bound, maxval=bound)
    x = jax.random.normal(kx, (batch, hidden_dim), jnp.float32)

    q = jax.block_until_ready(clustering_layer_forward(x, mu, alpha=1.0))
    assert q.shape == (batch, n_clusters)
    assert jnp.allclose(q, _reference(x, mu, 1.0), atol=1e-5, rtol=1e-5)

    # Integer Student-t exponent (alpha=3 -> exponent 2.0, VPU-multiply path).
    q3 = jax.block_until_ready(clustering_layer_forward(x, mu, alpha=3.0))
    assert jnp.allclose(q3, _reference(x, mu, 3.0), atol=1e-4, rtol=1e-4)

    # Non-integer exponent (alpha=2 -> exponent 1.5, pow path).
    q2 = jax.block_until_ready(clustering_layer_forward(x, mu, alpha=2.0))
    assert jnp.allclose(q2, _reference(x, mu, 2.0), atol=1e-4, rtol=1e-4)

    # --- Case 2: D >= 128, K < 128 -> lane-dense padded-output path. ---
    n_clusters2, hidden_dim2, batch2 = 10, 256, 24
    bound2 = (6.0 / (n_clusters2 + hidden_dim2)) ** 0.5
    mu_b = jax.random.uniform(kmu2, (n_clusters2, hidden_dim2), jnp.float32,
                              minval=-bound2, maxval=bound2)
    x_b = jax.random.normal(kx2, (batch2, hidden_dim2), jnp.float32)
    q_b = jax.block_until_ready(clustering_layer_forward(x_b, mu_b, alpha=1.0))
    assert q_b.shape == (batch2, n_clusters2)
    assert jnp.allclose(q_b, _reference(x_b, mu_b, 1.0), atol=1e-5, rtol=1e-5)

    # --- Case 3: bf16 inputs stay bf16 through the MXU dot. ---
    x_bf = x_b.astype(jnp.bfloat16)
    mu_bf = mu_b.astype(jnp.bfloat16)
    q_bf = jax.block_until_ready(clustering_layer_forward(x_bf, mu_bf, alpha=1.0))
    assert q_bf.shape == (batch2, n_clusters2) and q_bf.dtype == jnp.bfloat16
    assert jnp.allclose(jnp.sum(q_bf.astype(jnp.float32), axis=1), 1.0, atol=1e-2)
    assert jnp.allclose(q_bf.astype(jnp.float32), _reference(x_bf, mu_bf, 1.0),
                        atol=5e-2, rtol=5e-2)

    print("KERNEL_OK")
</pallas_src>

<mosaic_0001>
module attributes {stable_mosaic.version = 11 : i64} {
  func.func @_dec_kernel(%arg0: i32, %arg1: memref<8x32xf32, #tpu.memory_space<vmem>>, %arg2: memref<32x8xf32, #tpu.memory_space<vmem>>, %arg3: memref<1x8xf32, #tpu.memory_space<vmem>>, %arg4: memref<8x8xf32, #tpu.memory_space<vmem>>) attributes {dimension_semantics = [#tpu.dimension_semantics<parallel>], iteration_bounds = array<i64: 2>, scalar_prefetch = 0 : i64, scratch_operands = 0 : i64, tpu.core_type = #tpu.core_type<tc>, window_params = [{transform_indices = @transform_0, window_bounds = array<i64: 8, 32>}, {pipeline_mode = #tpu.pipeline_mode<synchronous>, transform_indices = @transform_1, window_bounds = array<i64: 32, 8>}, {pipeline_mode = #tpu.pipeline_mode<synchronous>, transform_indices = @transform_2, window_bounds = array<i64: 1, 8>}, {transform_indices = @transform_3, window_bounds = array<i64: 8, 8>}]} {
    %c0 = arith.constant 0 : index
    %c0_0 = arith.constant 0 : index
    %0 = vector.load %arg1[%c0, %c0_0] : memref<8x32xf32, #tpu.memory_space<vmem>>, vector<8x32xf32>
    %c0_1 = arith.constant 0 : index
    %c0_2 = arith.constant 0 : index
    %1 = vector.load %arg2[%c0_1, %c0_2] : memref<32x8xf32, #tpu.memory_space<vmem>>, vector<32x8xf32>
    %c0_3 = arith.constant 0 : index
    %c0_4 = arith.constant 0 : index
    %2 = vector.load %arg3[%c0_3, %c0_4] : memref<1x8xf32, #tpu.memory_space<vmem>>, vector<1x8xf32>
    %3 = arith.mulf %0, %0 : vector<8x32xf32>
    %cst = arith.constant dense<0.000000e+00> : vector<8xf32>
    %4 = vector.multi_reduction <add>, %3, %cst [1] : vector<8x32xf32> to vector<8xf32>
    %5 = vector.shape_cast %4 : vector<8xf32> to vector<8x1xf32>
    %cst_5 = arith.constant dense<0.000000e+00> : vector<8x8xf32>
    %6 = tpu.matmul %0, %1, %cst_5 {dimension_numbers = #tpu.dot_dimension_numbers<[1], [0], [0], [1], [0, 0, 1, 1], [], []>} : vector<8x32xf32>, vector<32x8xf32>, vector<8x8xf32> -> vector<8x8xf32>
    %7 = vector.broadcast %5 : vector<8x1xf32> to vector<8x8xf32>
    %8 = vector.broadcast %2 : vector<1x8xf32> to vector<8x8xf32>
    %9 = arith.addf %7, %8 : vector<8x8xf32>
    %cst_6 = arith.constant 2.000000e+00 : f32
    %10 = vector.broadcast %cst_6 : f32 to vector<8x8xf32>
    %11 = arith.mulf %10, %6 : vector<8x8xf32>
    %12 = arith.subf %9, %11 : vector<8x8xf32>
    %cst_7 = arith.constant 0.000000e+00 : f32
    %13 = vector.broadcast %cst_7 : f32 to vector<8x8xf32>
    %14 = arith.maximumf %12, %13 : vector<8x8xf32>
    %cst_8 = arith.constant 1.000000e+00 : f32
    %15 = vector.broadcast %cst_8 : f32 to vector<8x8xf32>
    %16 = arith.mulf %14, %15 : vector<8x8xf32>
    %cst_9 = arith.constant 1.000000e+00 : f32
    %17 = vector.broadcast %cst_9 : f32 to vector<8x8xf32>
    %18 = arith.addf %17, %16 : vector<8x8xf32>
    %cst_10 = arith.constant 1.000000e+00 : f32
    %19 = vector.broadcast %cst_10 : f32 to vector<8x8xf32>
    %20 = arith.divf %19, %18 : vector<8x8xf32>
    %cst_11 = arith.constant dense<0.000000e+00> : vector<8xf32>
    %21 = vector.multi_reduction <add>, %20, %cst_11 [1] : vector<8x8xf32> to vector<8xf32>
    %22 = vector.shape_cast %21 : vector<8xf32> to vector<8x1xf32>
    %23 = tpu.reciprocal %22 : vector<8x1xf32> -> vector<8x1xf32>
    %24 = vector.broadcast %23 : vector<8x1xf32> to vector<8x8xf32>
    %25 = arith.mulf %20, %24 : vector<8x8xf32>
    %c0_12 = arith.constant 0 : index
    %c0_13 = arith.constant 0 : index
    %26 = vector.load %arg4[%c0_12, %c0_13] : memref<8x8xf32, #tpu.memory_space<vmem>>, vector<8x8xf32>
    tpu.vector_store %arg4[%c0_12, %c0_13], %25 {strides = array<i32>} : memref<8x8xf32, #tpu.memory_space<vmem>>, vector<8x8xf32>,
    return
  }
  func.func @transform_0(%arg0: i32) -> (i32, i32) {
    %c0_i32 = arith.constant 0 : i32
    %c0_i32_0 = arith.constant 0 : i32
    return %arg0, %c0_i32 : i32, i32
  }
  func.func @transform_1(%arg0: i32) -> (i32, i32) {
    %c0_i32 = arith.constant 0 : i32
    %c0_i32_0 = arith.constant 0 : i32
    %c0_i32_1 = arith.constant 0 : i32
    return %c0_i32, %c0_i32_0 : i32, i32
  }
  func.func @transform_2(%arg0: i32) -> (i32, i32) {
    %c0_i32 = arith.constant 0 : i32
    %c0_i32_0 = arith.constant 0 : i32
    %c0_i32_1 = arith.constant 0 : i32
    return %c0_i32, %c0_i32_0 : i32, i32
  }
  func.func @transform_3(%arg0: i32) -> (i32, i32) {
    %c0_i32 = arith.constant 0 : i32
    %c0_i32_0 = arith.constant 0 : i32
    return %arg0, %c0_i32 : i32, i32
  }
}

</mosaic_0001>

<llo_original>
// kernel: tpu_custom_call.1
$region0: #{tpu_custom_call.1}
  #allocation0 [shape = 'u32[]', space=smem, size = 0x4, offset = 0x4, fixed_abs, tag = 'smem constant byte address 0x4 - core index']
  #allocation1 [shape = 'u32[72,128]{1,0:T(1,128)}', space=vmem, size = 0x9000, scoped, tag = 'internal scratch']
  %s0 = inlined_call_operand.vmem [shape: f32[16,32], index: 0, kind: input, shape index: {}]
  %s1 = inlined_call_operand.vmem [shape: f32[32,8], index: 1, kind: input, shape index: {}]
  %s2 = inlined_call_operand.vmem [shape: f32[1,8], index: 2, kind: input, shape index: {}]
  %s3 = inlined_call_operand.vmem [shape: f32[16,8], index: 3, kind: output, shape index: {}]
  %s4 = sld [smem:[#allocation0]]
  $region45: #{tpu_custom_call.1} parent=0
    _
  %s6 = ssub.s32 1, %s4
  %s7 = scalar_select 0, %s6, %s4
  loop: start=0, step=1, limit=4
  $region2: #{tpu_custom_call.1} parent=0 // loop_pre_header
    _
  $region3: #{tpu_custom_call.1} parent=0 // loop_header
    %s9 = sphi 0, %s13
    %p10 = scmp.ge.s32.totalorder %s9, 4
    %s19 = sphi 0, %s21
    %s22 = sphi 0, %s19
    %s23 = sphi 0, %s22
    %s39 = sphi 0, %s23
    %s43 = sphi 0, %s43
    %s45 = sphi 0, %s43
    %s46 = sphi 0, %s45
    %s60 = sphi 0, %s46
    %s64 = sphi 0, %s64
    %s66 = sphi 0, %s64
    %s67 = sphi 0, %s66
    %s81 = sphi 0, %s67
    %s87 = sphi 0, %s89
    %s90 = sphi 0, %s87
    %s91 = sphi 0, %s90
    %s107 = sphi 0, %s91
  $region4: #{tpu_custom_call.1} parent=0 // loop_header_branch
    %12 = sbr.rel (%p10) target = $region8
  $region5: #{tpu_custom_call.1} parent=0 // loop_body
    %s14 = ssub.s32 %s9, 1
    %s15 = ssub.s32 %s9, 2
    %s16 = sadd.s32 %s9, 1
    %s17 = ssub.s32 %s9, %s16
    %p18 = scmp.eq.s32.totalorder %s17, 0
    %s20 = sadd.s32 %s19, 1
    %s21 = scalar_select %p18, %s19, %s20
    %p24 = pneg %p18
    %p25 = scmp.eq.s32.totalorder %s9, 1
    %p26 = por %p24, %p25
    %p27 = scmp.ne.s32.totalorder %s19, %s22
    %p28 = scmp.eq.s32.totalorder %s9, 0
    %p29 = por %p27, %p28
    %p30 = scmp.ne.s32.totalorder %s19, %s22
    %p31 = scmp.eq.s32.totalorder %s14, 1
    %p32 = por %p30, %p31
    %p33 = scmp.ne.s32.totalorder %s22, %s23
    %p34 = scmp.eq.s32.totalorder %s14, 0
    %p35 = por %p33, %p34
    %p36 = scmp.ne.s32.totalorder %s22, %s23
    %p37 = scmp.eq.s32.totalorder %s15, 1
    %p38 = por %p36, %p37
    %p40 = scmp.ne.s32.totalorder %s23, %s39
    %p41 = scmp.eq.s32.totalorder %s15, 0
    %p42 = por %p40, %p41
    %s44 = sadd.s32 %s43, 1
    %p47 = scmp.eq.s32.totalorder %s9, 1
    %p48 = scmp.ne.s32.totalorder %s43, %s45
    %p49 = scmp.eq.s32.totalorder %s9, 0
    %p50 = por %p48, %p49
    %p51 = scmp.ne.s32.totalorder %s43, %s45
    %p52 = scmp.eq.s32.totalorder %s14, 1
    %p53 = por %p51, %p52
    %p54 = scmp.ne.s32.totalorder %s45, %s46
    %p55 = scmp.eq.s32.totalorder %s14, 0
    %p56 = por %p54, %p55
    %p57 = scmp.ne.s32.totalorder %s45, %s46
    %p58 = scmp.eq.s32.totalorder %s15, 1
    %p59 = por %p57, %p58
    %p61 = scmp.ne.s32.totalorder %s46, %s60
    %p62 = scmp.eq.s32.totalorder %s15, 0
    %p63 = por %p61, %p62
    %s65 = sadd.s32 %s64, 1
    %p68 = scmp.eq.s32.totalorder %s9, 1
    %p69 = scmp.ne.s32.totalorder %s64, %s66
    %p70 = scmp.eq.s32.totalorder %s9, 0
    %p71 = por %p69, %p70
    %p72 = scmp.ne.s32.totalorder %s64, %s66
    %p73 = scmp.eq.s32.totalorder %s14, 1
    %p74 = por %p72, %p73
    %p75 = scmp.ne.s32.totalorder %s66, %s67
    %p76 = scmp.eq.s32.totalorder %s14, 0
    %p77 = por %p75, %p76
    %p78 = scmp.ne.s32.totalorder %s66, %s67
    %p79 = scmp.eq.s32.totalorder %s15, 1
    %p80 = por %p78, %p79
    %p82 = scmp.ne.s32.totalorder %s67, %s81
    %p83 = scmp.eq.s32.totalorder %s15, 0
    %p84 = por %p82, %p83
    %s85 = ssub.s32 %s9, %s16
    %p86 = scmp.eq.s32.totalorder %s85, 0
    %s88 = sadd.s32 %s87, 1
    %s89 = scalar_select %p86, %s87, %s88
    %p92 = pneg %p86
    %p93 = scmp.eq.s32.totalorder %s9, 1
    %p94 = por %p92, %p93
    %p95 = scmp.ne.s32.totalorder %s87, %s90
    %p96 = scmp.eq.s32.totalorder %s9, 0
    %p97 = por %p95, %p96
    %p98 = scmp.ne.s32.totalorder %s87, %s90
    %p99 = scmp.eq.s32.totalorder %s14, 1
    %p100 = por %p98, %p99
    %p101 = scmp.ne.s32.totalorder %s90, %s91
    %p102 = scmp.eq.s32.totalorder %s14, 0
    %p103 = por %p101, %p102
    %p104 = scmp.ne.s32.totalorder %s90, %s91
    %p105 = scmp.eq.s32.totalorder %s15, 1
    %p106 = por %p104, %p105
    %p108 = scmp.ne.s32.totalorder %s91, %s107
    %p109 = scmp.eq.s32.totalorder %s15, 0
    %p110 = por %p108, %p109
    %p111 = scmp.le.s32.totalorder 1, %s9
    %p112 = scmp.lt.s32.totalorder %s9, 3
    %p113 = pnand %p111, %p112
    %p114 = pneg %p113
    // Predicated region
    $region9: #{tpu_custom_call.1} parent=5 // pred_check
      _
    $region10: #{tpu_custom_call.1} parent=5 // pred_check_branch
      %116 = sbr.rel (%p113) target = $region12
    $region11: #{tpu_custom_call.1} parent=5 // pred_region
      %s117 = ssub.s32 %s9, 1
      // Predicated region
      $region13: #{tpu_custom_call.1} parent=11 // pred_check
        %p118 = pneg %p56
      $region14: #{tpu_custom_call.1} parent=11 // pred_check_branch
        %120 = sbr.rel (%p118) target = $region16
      $region15: #{tpu_custom_call.1} parent=11 // pred_region
        _
      $region16: #{tpu_custom_call.1} parent=11 // pred_fallthru
        _
      // Predicated region
      $region17: #{tpu_custom_call.1} parent=11 // pred_check
        %p121 = pneg %p77
      $region18: #{tpu_custom_call.1} parent=11 // pred_check_branch
        %123 = sbr.rel (%p121) target = $region20
      $region19: #{tpu_custom_call.1} parent=11 // pred_region
        _
      $region20: #{tpu_custom_call.1} parent=11 // pred_fallthru
        _
    $region12: #{tpu_custom_call.1} parent=5 // pred_fallthru
      _
    %p124 = scmp.lt.s32.totalorder %s9, 2
    // Predicated region
    $region21: #{tpu_custom_call.1} parent=5 // pred_check
      %p125 = pneg %p124
    $region22: #{tpu_custom_call.1} parent=5 // pred_check_branch
      %127 = sbr.rel (%p125) target = $region24
    $region23: #{tpu_custom_call.1} parent=5 // pred_region
      // Predicated region
      $region25: #{tpu_custom_call.1} parent=23 // pred_check
        %p128 = pneg %p29
      $region26: #{tpu_custom_call.1} parent=23 // pred_check_branch
        %130 = sbr.rel (%p128) target = $region28
      $region27: #{tpu_custom_call.1} parent=23 // pred_region
        %p131 = scmp.lt.s32.totalorder %s9, 1
        %s132 = scalar_select %p131, %s9, 1
        %s133 = smul.addr %s132, 8
        %s134 = scalar_lea.vmem %s0, %s133
      $region28: #{tpu_custom_call.1} parent=23 // pred_fallthru
        _
    $region24: #{tpu_custom_call.1} parent=5 // pred_fallthru
      _
    %p135 = scmp.le.s32.totalorder 1, %s9
    %p136 = scmp.lt.s32.totalorder %s9, 3
    %p137 = pnand %p135, %p136
    %p138 = pneg %p137
    // Predicated region
    $region29: #{tpu_custom_call.1} parent=5 // pred_check
      _
    $region30: #{tpu_custom_call.1} parent=5 // pred_check_branch
      %140 = sbr.rel (%p137) target = $region32
    $region31: #{tpu_custom_call.1} parent=5 // pred_region
      %s141 = ssub.s32 %s9, 1
      %p142 = scmp.lt.s32.totalorder %s14, 1
      %s143 = scalar_select %p142, %s14, 1
      %s144 = smul.addr %s143, 8
      %s145 = scalar_lea.vmem %s0, %s144
      %p146 = pneg %p35
      %p147 = pneg %p32
      %p148 = pneg %p56
      %p149 = pneg %p53
      %p150 = pneg %p77
      %p151 = pneg %p74
      %p152 = pneg %p103
      %p153 = pneg %p100
      %p154 = scmp.lt.s32.totalorder %s14, 1
      %s155 = scalar_select %p154, %s14, 1
      %s156 = smul.addr %s155, 8
      %s157 = scalar_lea.vmem %s3, %s156
      %p158 = scmp.lt.s32.totalorder %s14, 1
      %s159 = scalar_select %p158, %s14, 1
      %s160 = smul.addr %s159, 8
      %s161 = scalar_lea.vmem %s0, %s160
      %p162 = scmp.lt.s32.totalorder %s14, 1
      %s163 = scalar_select %p162, %s14, 1
      %s164 = smul.addr %s163, 8
      %s165 = scalar_lea.vmem %s3, %s164
      %v166 = vld [vmem:[%s161] sm:$0xff]
      %v167 = vld [vmem:[%s1] sm:$0xff]
      %v168 = vld [vmem:[%s1 + $0x8] sm:$0xff]
      %v169 = vld [vmem:[%s1 + $0x10] sm:$0xff]
      %v170 = vld [vmem:[%s1 + $0x18] sm:$0xff]
      %v171 = vld [vmem:[%s2] sm:$0x1]
      %v172 = vmul.f32 %v166, %v166
      %vm173 = vcmask 261120
      %v174 = vsel %vm173, %v172, 0.0
      %175 = vadd.xlane.f32.xlu0 %v174
      %v176 = vpop.xlane.xlu0 %175
      %v178 = vsel %vm173, %v166, 0
      %180 = vmatpush.msra.mxu0 0.0
      %181 = vmatpush.msra.mxu0 0.0
      %182 = vmatpush.msra.mxu0 0.0
      %183 = vmatpush.msra.mxu0 0.0
      %184 = vmatpush.msra.mxu0 0.0
      %185 = vmatpush.msra.mxu0 0.0
      %186 = vmatpush.msra.mxu0 0.0
      %187 = vmatpush.msra.mxu0 0.0
      %188 = vmatpush.msra.mxu0 0.0
      %189 = vmatpush.msra.mxu0 0.0
      %190 = vmatpush.msra.mxu0 0.0
      %191 = vmatpush.msra.mxu0 0.0
      %192 = vmatpush.msra.mxu0 %v170
      %193 = vmatpush.msra.mxu0 %v169
      %194 = vmatpush.msra.mxu0 %v168
      %195 = vmatpush.msra.mxu0 %v167
      %196 = vmatmul.f32.gmra.mxu0 %v178
      %v197 = vpop.f32.mrf.mxu0
      %v198 = vadd.f32 0.0, %v197
      %199 = vdwg.mxu0
      %v201 = vperm.slane %v171, 0
      %v203 = vadd.f32 %v176, %v201
      %v204 = vmul.f32 %v198, 2.0
      %v205 = vsub.f32 %v203, %v204
      %v206 = vmax.f32 %v205, 0.0
      %v207 = vadd.f32 %v206, 1.0
      %v208 = vrcp.pop %v207
      %v209 = vmul.f32 %v207, %v208
      %v210 = vsub.f32 1.0, %v209
      %v211 = vmul.f32 %v208, %v210
      %v212 = vadd.f32 %v208, %v211
      %vm213 = vweird.f32 %v207
      %vm214 = vweird.f32 %v208
      %vm215 = vmor %vm213, %vm214
      %v216 = vsel %vm215, %v208, %v212
      %v217 = vand.u32 2147483647, %v207
      %vm218 = vcmp.eq.f32.partialorder %v217, 8.507059e+37
      %v219 = vand.u32 %v207, 2147483648
      %v220 = vor.u32 1.1754944e-38, %v219
      %v221 = vsel %vm218, %v220, %v216
      %v222 = vmul.f32 1.0, %v221
      %vm223 = vcmask 64512
      %v224 = vsel %vm223, %v222, 0.0
      %225 = vadd.xlane.f32.xlu0 %v224
      %v226 = vpop.xlane.xlu0 %225
      %v227 = vrcp.pop %v226
      %v228 = vmul.f32 %v226, %v227
      %v229 = vsub.f32 1.0, %v228
      %v230 = vmul.f32 %v227, %v229
      %v231 = vadd.f32 %v227, %v230
      %vm232 = vweird.f32 %v226
      %vm233 = vweird.f32 %v227
      %vm234 = vmor %vm232, %vm233
      %v235 = vsel %vm234, %v227, %v231
      %v236 = vand.u32 2147483647, %v226
      %vm237 = vcmp.eq.f32.partialorder %v236, 8.507059e+37
      %v238 = vand.u32 %v226, 2147483648
      %v239 = vor.u32 1.1754944e-38, %v238
      %v240 = vsel %vm237, %v239, %v235
      %v241 = vmul.f32 %v222, %v240
      %242 = vst.msk [vmem:[%s165] sm:$0xff] %vm223, %v241
      %p243 = scmp.lt.s32.totalorder %s14, 1
      %s244 = scalar_select %p243, %s14, 1
      %s245 = smul.addr %s244, 8
      %s246 = scalar_lea.vmem %s3, %s245
      // Predicated region
      $region33: #{tpu_custom_call.1} parent=31 // pred_check
        %p247 = pneg %p100
      $region34: #{tpu_custom_call.1} parent=31 // pred_check_branch
        %249 = sbr.rel (%p247) target = $region36
      $region35: #{tpu_custom_call.1} parent=31 // pred_region
        _
      $region36: #{tpu_custom_call.1} parent=31 // pred_fallthru
        _
    $region32: #{tpu_custom_call.1} parent=5 // pred_fallthru
      _
    %p250 = scmp.le.s32.totalorder 2, %s9
    // Predicated region
    $region37: #{tpu_custom_call.1} parent=5 // pred_check
      %p251 = pneg %p250
    $region38: #{tpu_custom_call.1} parent=5 // pred_check_branch
      %253 = sbr.rel (%p251) target = $region40
    $region39: #{tpu_custom_call.1} parent=5 // pred_region
      %s254 = ssub.s32 %s9, 2
      // Predicated region
      $region41: #{tpu_custom_call.1} parent=39 // pred_check
        %p255 = pneg %p106
      $region42: #{tpu_custom_call.1} parent=39 // pred_check_branch
        %257 = sbr.rel (%p255) target = $region44
      $region43: #{tpu_custom_call.1} parent=39 // pred_region
        %p258 = scmp.lt.s32.totalorder %s15, 1
        %s259 = scalar_select %p258, %s15, 1
        %s260 = smul.addr %s259, 8
        %s261 = scalar_lea.vmem %s3, %s260
      $region44: #{tpu_custom_call.1} parent=39 // pred_fallthru
        _
    $region40: #{tpu_custom_call.1} parent=5 // pred_fallthru
      _
  $region6: #{tpu_custom_call.1} parent=0 // loop_footer
    %s13 = sadd.s32 1, %s9
  $region7: #{tpu_custom_call.1} parent=0 // loop_footer_branch
    %8 = sbr.rel target = $region3
  $region8: #{tpu_custom_call.1} parent=0 // loop_exit
    _

</llo_original>
